<compile_context>
chip_gen: v7x
topology: tpu7x:2x2x1
jax: 0.10.0
libtpu: 0.0.40
codegen_flags: <defaults>
</compile_context>

<pallas_src>
import jax
import jax.numpy as jnp
from jax.experimental import pallas as pl
from jax.experimental.pallas import tpu as pltpu


def grn_kernel(x_ref, gamma_ref, beta_ref, o_ref):
    # x_ref block: (Bt, C, HW)   gamma_ref/beta_ref block: (1, C, 1)
    x = x_ref[...]
    xf = x.astype(jnp.float32)

    # L2 norm over the (flattened, zero-padded) spatial axis, per (b, c).
    gx = jnp.sqrt(jnp.sum(xf * xf, axis=-1, keepdims=True))       # (Bt, C, 1)

    # Mean of Gx over the channel axis.
    gx_mean = jnp.mean(gx, axis=1, keepdims=True)                 # (Bt, 1, 1)
    denom = gx_mean + 1e-6

    # Approximate reciprocal on the EUP, refined with Newton-Raphson steps on
    # the tiny (Bt, 1, 1) vector -> full f32 accuracy, no VPU divide.
    inv = pl.reciprocal(denom, approx=True)
    inv = inv * (2.0 - denom * inv)
    inv = inv * (2.0 - denom * inv)
    nx = gx * inv                                                 # (Bt, C, 1)

    g = gamma_ref[...].astype(jnp.float32)                        # (1, C, 1)
    b = beta_ref[...].astype(jnp.float32)                         # (1, C, 1)

    # Fused apply: gamma*(x*nx) + beta + x  ==  x * (gamma*nx + 1) + beta
    scale = g * nx + 1.0                                          # (Bt, C, 1)
    y = xf * scale + b                                            # (Bt, C, HW)
    o_ref[...] = y.astype(o_ref.dtype)


def _choose_batch_tile(B, C, HW, dtype_bytes, vmem_budget_bytes):
    """Largest divisor of B whose pipelined footprint fits the VMEM budget.

    The BlockSpec pipeline holds input + output, each double-buffered, so the
    footprint is ~4x the block size. Budget is conservative so the same choice
    is safe on v7x (64 MiB VMEM) as well as v5e/v6e (128 MiB).
    """
    per_batch_bytes = C * HW * dtype_bytes
    max_block_bytes = max(vmem_budget_bytes // 4, per_batch_bytes)
    max_bt = max(1, max_block_bytes // per_batch_bytes)
    bt = 1
    for d in range(1, B + 1):
        if B % d == 0 and d <= max_bt:
            bt = d
    return bt


def grn_forward(x, gamma, beta, *, vmem_budget_bytes=24 * 1024 * 1024):
    """x: (B, C, H, W); gamma/beta: (1, C, 1, 1)."""
    B, C, H, W = x.shape
    HW = H * W

    # Lane-dense layout: pad flattened spatial axis to a multiple of 128.
    # Zero padding is semantically safe (doesn't change the L2 norm); padded
    # output columns (== beta) are cropped below.
    HW_pad = ((HW + 127) // 128) * 128
    x_flat = x.reshape(B, C, HW)
    if HW_pad != HW:
        x_flat = jnp.pad(x_flat, ((0, 0), (0, 0), (0, HW_pad - HW)))

    gamma_flat = gamma.reshape(1, C, 1)
    beta_flat = beta.reshape(1, C, 1)

    dtype_bytes = jnp.dtype(x.dtype).itemsize
    bt = _choose_batch_tile(B, C, HW_pad, dtype_bytes, vmem_budget_bytes)
    grid = (B // bt,)

    # TODO(synk): for v7x (2 TensorCores) with B == 1 a second parallel axis
    # over HW tiles would be needed to use both cores; single-axis grid here.
    cost = pl.CostEstimate(
        flops=3 * B * C * HW_pad,                    # square, scale-FMA
        transcendentals=B * C + B,                   # sqrt per (b,c) + recip per b
        bytes_accessed=2 * B * C * HW_pad * dtype_bytes,
    )

    out_flat = pl.pallas_call(
        grn_kernel,
        out_shape=jax.ShapeDtypeStruct((B, C, HW_pad), x.dtype),
        grid_spec=pltpu.PrefetchScalarGridSpec(
            num_scalar_prefetch=0,
            grid=grid,
            in_specs=[
                # Bt batch elements per grid step; (C, HW_pad) are full dims.
                pl.BlockSpec((bt, C, HW_pad), lambda i: (i, 0, 0)),
                pl.BlockSpec((1, C, 1), lambda i: (0, 0, 0)),
                pl.BlockSpec((1, C, 1), lambda i: (0, 0, 0)),
            ],
            out_specs=pl.BlockSpec((bt, C, HW_pad), lambda i: (i, 0, 0)),
        ),
        compiler_params=pltpu.CompilerParams(
            dimension_semantics=("parallel",),
        ),
        cost_estimate=cost,
    )(x_flat, gamma_flat, beta_flat)

    if HW_pad != HW:
        out_flat = out_flat[:, :, :HW]
    return out_flat.reshape(B, C, H, W)


def grn_reference(x, gamma, beta):
    """Plain-JAX reference mirroring the PyTorch forward (dim=2)."""
    gx = jnp.sqrt(jnp.sum(x * x, axis=(2, 3), keepdims=True))       # (B,C,1,1)
    nx = gx / (jnp.mean(gx, axis=1, keepdims=True) + 1e-6)          # (B,C,1,1)
    return gamma * (x * nx) + beta + x


if __name__ == "__main__":
    key = jax.random.PRNGKey(0)
    k_x, k_g, k_b = jax.random.split(key, 3)

    B, C, H, W = 2, 4, 16, 16
    x = jax.random.normal(k_x, (B, C, H, W), dtype=jnp.float32)
    # Module __init__ shapes: gamma, beta = (1, C, 1, 1)
    gamma = 0.1 * jax.random.normal(k_g, (1, C, 1, 1), dtype=jnp.float32)
    beta = 0.1 * jax.random.normal(k_b, (1, C, 1, 1), dtype=jnp.float32)

    out = grn_forward(x, gamma, beta)
    jax.block_until_ready(out)

    ref = grn_reference(x, gamma, beta)
    assert out.shape == (B, C, H, W)
    assert jnp.allclose(out, ref, atol=1e-5, rtol=1e-5), (
        f"max abs err = {jnp.max(jnp.abs(out - ref))}"
    )

    print("KERNEL_OK")
</pallas_src>

<mosaic_0001>
module attributes {stable_mosaic.version = 11 : i64} {
  func.func @grn_kernel(%arg0: i32, %arg1: memref<2x4x256xf32, #tpu.memory_space<vmem>>, %arg2: memref<1x4x1xf32, #tpu.memory_space<vmem>>, %arg3: memref<1x4x1xf32, #tpu.memory_space<vmem>>, %arg4: memref<2x4x256xf32, #tpu.memory_space<vmem>>) attributes {dimension_semantics = [#tpu.dimension_semantics<parallel>], iteration_bounds = array<i64: 1>, scalar_prefetch = 0 : i64, scratch_operands = 0 : i64, tpu.core_type = #tpu.core_type<tc>, window_params = [{transform_indices = @transform_0, window_bounds = array<i64: 2, 4, 256>}, {pipeline_mode = #tpu.pipeline_mode<synchronous>, transform_indices = @transform_1, window_bounds = array<i64: 1, 4, 1>}, {pipeline_mode = #tpu.pipeline_mode<synchronous>, transform_indices = @transform_2, window_bounds = array<i64: 1, 4, 1>}, {transform_indices = @transform_3, window_bounds = array<i64: 2, 4, 256>}]} {
    %c0 = arith.constant 0 : index
    %c0_0 = arith.constant 0 : index
    %c0_1 = arith.constant 0 : index
    %0 = vector.load %arg1[%c0, %c0_0, %c0_1] : memref<2x4x256xf32, #tpu.memory_space<vmem>>, vector<2x4x256xf32>
    %1 = arith.mulf %0, %0 : vector<2x4x256xf32>
    %cst = arith.constant dense<0.000000e+00> : vector<2x4xf32>
    %2 = vector.multi_reduction <add>, %1, %cst [2] : vector<2x4x256xf32> to vector<2x4xf32>
    %3 = vector.shape_cast %2 : vector<2x4xf32> to vector<2x4x1xf32>
    %4 = math.sqrt %3 : vector<2x4x1xf32>
    %cst_2 = arith.constant dense<0.000000e+00> : vector<2x1xf32>
    %5 = vector.multi_reduction <add>, %4, %cst_2 [1] : vector<2x4x1xf32> to vector<2x1xf32>
    %6 = vector.shape_cast %5 : vector<2x1xf32> to vector<2x1x1xf32>
    %cst_3 = arith.constant 4.000000e+00 : f32
    %7 = vector.broadcast %cst_3 : f32 to vector<2x1x1xf32>
    %8 = arith.divf %6, %7 : vector<2x1x1xf32>
    %cst_4 = arith.constant 9.99999997E-7 : f32
    %9 = vector.broadcast %cst_4 : f32 to vector<2x1x1xf32>
    %10 = arith.addf %8, %9 : vector<2x1x1xf32>
    %11 = tpu.reciprocal %10 {approx = true} : vector<2x1x1xf32> -> vector<2x1x1xf32>
    %12 = arith.mulf %10, %11 : vector<2x1x1xf32>
    %cst_5 = arith.constant 2.000000e+00 : f32
    %13 = vector.broadcast %cst_5 : f32 to vector<2x1x1xf32>
    %14 = arith.subf %13, %12 : vector<2x1x1xf32>
    %15 = arith.mulf %11, %14 : vector<2x1x1xf32>
    %16 = arith.mulf %10, %15 : vector<2x1x1xf32>
    %cst_6 = arith.constant 2.000000e+00 : f32
    %17 = vector.broadcast %cst_6 : f32 to vector<2x1x1xf32>
    %18 = arith.subf %17, %16 : vector<2x1x1xf32>
    %19 = arith.mulf %15, %18 : vector<2x1x1xf32>
    %20 = vector.broadcast %19 : vector<2x1x1xf32> to vector<2x4x1xf32>
    %21 = arith.mulf %4, %20 : vector<2x4x1xf32>
    %c0_7 = arith.constant 0 : index
    %c0_8 = arith.constant 0 : index
    %c0_9 = arith.constant 0 : index
    %22 = vector.load %arg2[%c0_7, %c0_8, %c0_9] : memref<1x4x1xf32, #tpu.memory_space<vmem>>, vector<1x4x1xf32>
    %c0_10 = arith.constant 0 : index
    %c0_11 = arith.constant 0 : index
    %c0_12 = arith.constant 0 : index
    %23 = vector.load %arg3[%c0_10, %c0_11, %c0_12] : memref<1x4x1xf32, #tpu.memory_space<vmem>>, vector<1x4x1xf32>
    %24 = vector.broadcast %22 : vector<1x4x1xf32> to vector<2x4x1xf32>
    %25 = arith.mulf %24, %21 : vector<2x4x1xf32>
    %cst_13 = arith.constant 1.000000e+00 : f32
    %26 = vector.broadcast %cst_13 : f32 to vector<2x4x1xf32>
    %27 = arith.addf %25, %26 : vector<2x4x1xf32>
    %28 = vector.broadcast %27 : vector<2x4x1xf32> to vector<2x4x256xf32>
    %29 = arith.mulf %0, %28 : vector<2x4x256xf32>
    %30 = vector.broadcast %23 : vector<1x4x1xf32> to vector<2x4x256xf32>
    %31 = arith.addf %29, %30 : vector<2x4x256xf32>
    %c0_14 = arith.constant 0 : index
    %c0_15 = arith.constant 0 : index
    %c0_16 = arith.constant 0 : index
    %32 = vector.load %arg4[%c0_14, %c0_15, %c0_16] : memref<2x4x256xf32, #tpu.memory_space<vmem>>, vector<2x4x256xf32>
    tpu.vector_store %arg4[%c0_14, %c0_15, %c0_16], %31 {strides = array<i32>} : memref<2x4x256xf32, #tpu.memory_space<vmem>>, vector<2x4x256xf32>,
    return
  }
  func.func @transform_0(%arg0: i32) -> (i32, i32, i32) {
    %c0_i32 = arith.constant 0 : i32
    %c0_i32_0 = arith.constant 0 : i32
    %c0_i32_1 = arith.constant 0 : i32
    return %arg0, %c0_i32, %c0_i32_0 : i32, i32, i32
  }
  func.func @transform_1(%arg0: i32) -> (i32, i32, i32) {
    %c0_i32 = arith.constant 0 : i32
    %c0_i32_0 = arith.constant 0 : i32
    %c0_i32_1 = arith.constant 0 : i32
    %c0_i32_2 = arith.constant 0 : i32
    return %c0_i32, %c0_i32_0, %c0_i32_1 : i32, i32, i32
  }
  func.func @transform_2(%arg0: i32) -> (i32, i32, i32) {
    %c0_i32 = arith.constant 0 : i32
    %c0_i32_0 = arith.constant 0 : i32
    %c0_i32_1 = arith.constant 0 : i32
    %c0_i32_2 = arith.constant 0 : i32
    return %c0_i32, %c0_i32_0, %c0_i32_1 : i32, i32, i32
  }
  func.func @transform_3(%arg0: i32) -> (i32, i32, i32) {
    %c0_i32 = arith.constant 0 : i32
    %c0_i32_0 = arith.constant 0 : i32
    %c0_i32_1 = arith.constant 0 : i32
    return %arg0, %c0_i32, %c0_i32_0 : i32, i32, i32
  }
}

</mosaic_0001>

<llo_original>
// kernel: tpu_custom_call.1
$region0: #{tpu_custom_call.1}
  #allocation0 [shape = 'u32[]', space=smem, size = 0x4, offset = 0x4, fixed_abs, tag = 'smem constant byte address 0x4 - core index']
  #allocation1 [shape = 'u32[144,128]{1,0:T(1,128)}', space=vmem, size = 0x12000, scoped, tag = 'internal scratch']
  %s0 = inlined_call_operand.hbm [shape: f32[2,4,256], index: 0, kind: input, shape index: {}]
  %s1 = inlined_call_operand.vmem [shape: f32[1,4,1], index: 1, kind: input, shape index: {}]
  %s2 = inlined_call_operand.vmem [shape: f32[1,4,1], index: 2, kind: input, shape index: {}]
  %s3 = inlined_call_operand.hbm [shape: f32[2,4,256], index: 3, kind: output, shape index: {}]
  %s4 = sld [smem:[#allocation0]]
  $region26: #{tpu_custom_call.1} parent=0
    _
  %s6 = ssub.s32 1, %s4
  %s7 = scalar_select 0, %s6, %s4
  $region1: #{tpu_custom_call.1} parent=0
    #allocation2 [shape = 'u8[8192]{0}', space=vmem, size = 0x2000, scoped, tag = 'input window, operand 0, single buffered']
    #allocation3 [shape = 's32[1]{0}', space=sflag, size = 0x4, scoped, tag = 'scoped memory for tpu_custom_call.1']
    #allocation4 [shape = 's32[1]{0}', space=sflag, size = 0x4, scoped, tag = 'scoped memory for tpu_custom_call.1']
    #allocation5 [shape = 'u8[8192]{0}', space=vmem, size = 0x2000, scoped, tag = 'output window, operand 0, single buffered']
    %8 = vsyncpa [#allocation3], 0
    %9 = vsyncpa [#allocation4], 0
    // Predicated region
    $region2: #{tpu_custom_call.1} parent=1 // pred_check
      _
    $region3: #{tpu_custom_call.1} parent=1 // pred_check_branch
      %11 = sbr.rel (0) target = $region5
    $region4: #{tpu_custom_call.1} parent=1 // pred_region
      %s13 = ssub.s32 256, 256
      %14 = vsyncadd [#allocation3], %s13
      %s15 = sshll.u32 [#allocation2], 4
      %s16 = int_to_ptr.vmem [resolvable:$true] %s15
      %21 = dma.hbm_to_vmem [thread:$0]  %s0, 256, %s16, [#allocation3], 128, 128, 8
    $region5: #{tpu_custom_call.1} parent=1 // pred_fallthru
      _
    // Predicated region
    $region6: #{tpu_custom_call.1} parent=1 // pred_check
      _
    $region7: #{tpu_custom_call.1} parent=1 // pred_check_branch
      %23 = sbr.rel (0) target = $region9
    $region8: #{tpu_custom_call.1} parent=1 // pred_region
      _
    $region9: #{tpu_custom_call.1} parent=1 // pred_fallthru
      _
    // Predicated region
    $region10: #{tpu_custom_call.1} parent=1 // pred_check
      _
    $region11: #{tpu_custom_call.1} parent=1 // pred_check_branch
      %25 = sbr.rel (0) target = $region13
    $region12: #{tpu_custom_call.1} parent=1 // pred_region
      _
    $region13: #{tpu_custom_call.1} parent=1 // pred_fallthru
      _
    // Predicated region
    $region14: #{tpu_custom_call.1} parent=1 // pred_check
      _
    $region15: #{tpu_custom_call.1} parent=1 // pred_check_branch
      %27 = sbr.rel (0) target = $region17
    $region16: #{tpu_custom_call.1} parent=1 // pred_region
      %28 = dma.done [#allocation3], 256
    $region17: #{tpu_custom_call.1} parent=1 // pred_fallthru
      _
    %v29 = vld [vmem:[#allocation2] sm:$0xff]
    %v30 = vld [vmem:[#allocation2 + $0x8] sm:$0xff]
    %v31 = vmul.f32 %v29, %v29
    %v32 = vmul.f32 %v30, %v30
    %v35 = vcombine.high %v31, %v31
    %v36 = vcombine.high %v32, %v32
    %vm39 = vcmask 1043456
    %v40 = vsel %vm39, %v31, 0.0
    %v41 = vsel %vm39, %v35, 0.0
    %v42 = vadd.f32 %v40, %v41
    %43 = vadd.xlane.f32.xlu0 %v42
    %v44 = vpop.xlane.xlu0 %43
    %v45 = vsel %vm39, %v32, 0.0
    %v46 = vsel %vm39, %v36, 0.0
    %v47 = vadd.f32 %v45, %v46
    %48 = vadd.xlane.f32.xlu0 %v47
    %v49 = vpop.xlane.xlu0 %48
    %v50 = vrsqrt.pop %v44
    %v51 = vmul.f32 %v44, %v50
    %vm52 = vcmp.eq.f32.partialorder %v44, inf
    %v53 = vsel %vm52, %v44, %v51
    %vm54 = vcmp.eq.f32.partialorder %v44, 0.0
    %v55 = vand.u32 %v44, 2147483648
    %v56 = vsel %vm54, %v55, %v53
    %v57 = vrsqrt.pop %v49
    %v58 = vmul.f32 %v49, %v57
    %vm59 = vcmp.eq.f32.partialorder %v49, inf
    %v60 = vsel %vm59, %v49, %v58
    %vm61 = vcmp.eq.f32.partialorder %v49, 0.0
    %v62 = vand.u32 %v49, 2147483648
    %v63 = vsel %vm61, %v62, %v60
    %v64 = vsel %vm39, %v56, 0.0
    %v65 = vrot.slane %v64, 4
    %v66 = vadd.f32 %v64, %v65
    %v67 = vrot.slane %v66, 2
    %v68 = vadd.f32 %v66, %v67
    %v69 = vrot.slane %v68, 1
    %v70 = vadd.f32 %v68, %v69
    %v71 = vsel %vm39, %v63, 0.0
    %v72 = vrot.slane %v71, 4
    %v73 = vadd.f32 %v71, %v72
    %v74 = vrot.slane %v73, 2
    %v75 = vadd.f32 %v73, %v74
    %v76 = vrot.slane %v75, 1
    %v77 = vadd.f32 %v75, %v76
    %v78 = vrcp.pop 4.0
    %v79 = vmul.f32 %v70, %v78
    %v80 = vmul.f32 %v77, %v78
    %v81 = vadd.f32 %v79, 1e-06
    %v82 = vadd.f32 %v80, 1e-06
    %v83 = vrcp.pop %v81
    %v84 = vrcp.pop %v82
    %v85 = vmul.f32 %v81, %v83
    %v86 = vmul.f32 %v82, %v84
    %v87 = vsub.f32 2.0, %v85
    %v88 = vsub.f32 2.0, %v86
    %v89 = vmul.f32 %v83, %v87
    %v90 = vmul.f32 %v84, %v88
    %v91 = vmul.f32 %v81, %v89
    %v92 = vmul.f32 %v82, %v90
    %v93 = vsub.f32 2.0, %v91
    %v94 = vsub.f32 2.0, %v92
    %v95 = vmul.f32 %v89, %v93
    %v96 = vmul.f32 %v90, %v94
    %v97 = vmul.f32 %v56, %v95
    %v98 = vmul.f32 %v63, %v96
    %v99 = vld [vmem:[%s1] sm:$0xf]
    %v100 = vld [vmem:[%s2] sm:$0xf]
    %v101 = vmul.f32 %v99, %v97
    %v102 = vmul.f32 %v99, %v98
    %v103 = vadd.f32 %v101, 1.0
    %v104 = vadd.f32 %v102, 1.0
    %106 = vset.pattern.permute.xlu0 0
    %107 = vperm.xlu0 %106, %v103
    %v108 = vpop.permute.xlu0 %107
    %110 = vset.pattern.permute.xlu0 0
    %111 = vperm.xlu0 %110, %v104
    %v112 = vpop.permute.xlu0 %111
    %v114 = vunpack.c.l.s4 839922192
    %v115 = vunpack.c.0.s8 %v114
    %v116 = vlaneseq
    %v117 = vshrl.u32 %v116, 7
    %v118 = vsub.s32 %v115, %v117
    %v119 = vrot.slane %v108, %v118
    %v121 = vunpack.c.l.s4 839922192
    %v122 = vunpack.c.0.s8 %v121
    %v123 = vlaneseq
    %v124 = vshrl.u32 %v123, 7
    %v125 = vsub.s32 %v122, %v124
    %v126 = vrot.slane %v112, %v125
    %v129 = vmul.f32 %v29, %v119
    %v130 = vmul.f32 %v30, %v126
    %132 = vset.pattern.permute.xlu0 0
    %133 = vperm.xlu0 %132, %v100
    %v134 = vpop.permute.xlu0 %133
    %v136 = vunpack.c.l.s4 839922192
    %v137 = vunpack.c.0.s8 %v136
    %v138 = vlaneseq
    %v139 = vshrl.u32 %v138, 7
    %v140 = vsub.s32 %v137, %v139
    %v141 = vrot.slane %v134, %v140
    %v143 = vadd.f32 %v129, %v141
    %v144 = vadd.f32 %v130, %v141
    %145 = vst [vmem:[#allocation5] sm:$0xff] %v143
    %146 = vst [vmem:[#allocation5 + $0x8] sm:$0xff] %v144
    // Predicated region
    $region18: #{tpu_custom_call.1} parent=1 // pred_check
      _
    $region19: #{tpu_custom_call.1} parent=1 // pred_check_branch
      %148 = sbr.rel (0) target = $region21
    $region20: #{tpu_custom_call.1} parent=1 // pred_region
      %s150 = ssub.s32 256, 256
      %151 = vsyncadd [#allocation4], %s150
      %s152 = sshll.u32 [#allocation5], 4
      %s153 = int_to_ptr.vmem [resolvable:$true] %s152
      %158 = dma.vmem_to_hbm [thread:$0]  %s153, 256, %s3, [#allocation4], 128, 128, 8
    $region21: #{tpu_custom_call.1} parent=1 // pred_fallthru
      _
    // Predicated region
    $region22: #{tpu_custom_call.1} parent=1 // pred_check
      _
    $region23: #{tpu_custom_call.1} parent=1 // pred_check_branch
      %160 = sbr.rel (0) target = $region25
    $region24: #{tpu_custom_call.1} parent=1 // pred_region
      %161 = dma.done [#allocation4], 256
    $region25: #{tpu_custom_call.1} parent=1 // pred_fallthru
      _
    %162 = vsyncpa [#allocation3], 1
    %163 = vsyncpa [#allocation4], 1

</llo_original>
